<compile_context>
chip_gen: v6e
topology: v6e:2x2x1
jax: 0.10.0
libtpu: 0.0.40
codegen_flags: <defaults>
</compile_context>

<pallas_src>
import functools

import numpy as np

import jax
import jax.numpy as jnp
from jax import lax
from jax.experimental import pallas as pl
from jax.experimental.pallas import tpu as pltpu


_C_IN, _H, _W = 3, 6, 6      # flatten size 32*3*3 pins the spatial size to 6x6
_C_OUT = 32                  # conv1 output channels
_IN_FLAT = _C_IN * _H * _W   # 108 input features per sample
_IN_PAD = 128                # padded to one lane tile
_POOLED = 9 * _C_OUT         # 288 = pooled 3x3 positions * 32 channels
_BLK = 384                   # per-corner column block: 288 padded to 3*128 lanes
_HID = 128                   # dense1 width
_OUT = 10                    # dense2 width


# -----------------------------------------------------------------------------
# One-time static index table: fold spatial pad + im2col + pool-corner grouping
# into the conv weight.  Maps flattened W1 (plus a zero sentinel) into a dense
# (128, 4*384) matrix so that  x_flat @ wconv  yields the 4 pool-corner blocks,
# each already in the torch flatten (s*32 + c_out) column order.
# -----------------------------------------------------------------------------
def _build_conv_fold_index() -> np.ndarray:
    sentinel = _C_OUT * _C_IN * 9                      # -> appended zero entry
    idx = np.full((_IN_PAD, 4 * _BLK), sentinel, dtype=np.int32)
    for d in range(4):                                 # pool-window corner
        dy, dx = d // 2, d % 2
        for ph in range(3):
            for pw in range(3):
                s = ph * 3 + pw                        # pooled position
                h, w = 2 * ph + dy, 2 * pw + dx        # conv-output pixel
                for co in range(_C_OUT):
                    col = d * _BLK + s * _C_OUT + co
                    for ci in range(_C_IN):
                        for kh in range(3):
                            for kw in range(3):
                                ih, iw = h + kh - 1, w + kw - 1   # padding=1
                                if 0 <= ih < _H and 0 <= iw < _W:
                                    row = ci * _H * _W + ih * _W + iw
                                    idx[row, col] = ((co * _C_IN + ci) * 3 + kh) * 3 + kw
    return idx


@functools.lru_cache(maxsize=None)
def _conv_fold_index():
    return jnp.asarray(_build_conv_fold_index())


# -----------------------------------------------------------------------------
# One-time weight preprocessing (hoisted out of the per-forward path).
# -----------------------------------------------------------------------------
def prepare_params(W1, b1, W2, b2, W3, b3, dtype=jnp.float32):
    """dtype: storage dtype of the matmul weight operands (use jnp.bfloat16 for
    large batches; f32 accumulation is kept regardless)."""
    # conv1 (32,3,3,3) -> folded (128, 1536) pad+im2col+pool-corner weight.
    w1_flat = jnp.concatenate([W1.reshape(-1), jnp.zeros((1,), W1.dtype)])
    wconv = w1_flat[_conv_fold_index()].astype(dtype)                  # (128, 1536)

    # conv bias tiled per pooled position, padded 288 -> 384 lanes.
    b1t = jnp.pad(jnp.tile(b1, 9), (0, _BLK - _POOLED)).reshape(1, _BLK)
    b1t = b1t.astype(jnp.float32)

    # dense1: fold torch's (c, ph, pw) flatten order into a row permutation of
    # W2.T:  w2p[s*32 + c, j] = W2[j, c*9 + s];  pad rows 288 -> 384 (zeros).
    w2p = jnp.transpose(W2.reshape(_HID, _C_OUT, 9), (2, 1, 0)).reshape(_POOLED, _HID)
    w2p = jnp.pad(w2p, ((0, _BLK - _POOLED), (0, 0))).astype(dtype)    # (384, 128)
    b2r = b2.reshape(1, _HID).astype(jnp.float32)

    w3t = W3.T.astype(dtype)                                           # (128, 10)
    b3r = b3.reshape(1, _OUT).astype(jnp.float32)
    return wconv, b1t, w2p, b2r, w3t, b3r


# -----------------------------------------------------------------------------
# Fused kernel: conv(one matmul, im2col folded into weight) -> pool(+bias+ReLU)
#               -> dense1+ReLU -> dense2
# -----------------------------------------------------------------------------
def net1_fused_kernel(x_ref, wc_ref, b1_ref, w2_ref, b2_ref, w3_ref, b3_ref,
                      o_ref):
    # x_ref : (n_pad, 128)   raw flattened samples (features padded 108 -> 128)
    # wc_ref: (128, 1536)    folded conv weight, 4 corner blocks of 384 lanes
    # b1_ref: (1, 384)   w2_ref: (384, 128)  b2_ref: (1, 128)
    # w3_ref: (128, 10)  b3_ref: (1, 10)     o_ref: (N, 10)
    xv = x_ref[...].astype(wc_ref.dtype)

    # One MXU push for the whole convolution.
    z = jnp.dot(xv, wc_ref[...], preferred_element_type=jnp.float32)   # (n_pad, 1536)

    # 2x2 max-pool = max over the 4 corner column blocks (each 3 lane tiles,
    # offsets multiples of 128 -> pure VPU maxes, no relayout).
    zm = jnp.maximum(jnp.maximum(z[:, 0 * _BLK:1 * _BLK], z[:, 1 * _BLK:2 * _BLK]),
                     jnp.maximum(z[:, 2 * _BLK:3 * _BLK], z[:, 3 * _BLK:4 * _BLK]))

    # Bias + ReLU commute with the pool max (same bias per window, ReLU monotone).
    h = jnp.maximum(zm + b1_ref[...], 0.0)                              # (n_pad, 384)

    # dense1 + ReLU, dense2.  Rows 288..383 of w2 are zero, so the lane padding
    # of h contributes nothing.
    h = jnp.maximum(
        jnp.dot(h.astype(w2_ref.dtype), w2_ref[...],
                preferred_element_type=jnp.float32) + b2_ref[...], 0.0)  # (n_pad, 128)
    y = jnp.dot(h.astype(w3_ref.dtype), w3_ref[...],
                preferred_element_type=jnp.float32) + b3_ref[...]        # (n_pad, 10)

    o_ref[...] = y[:o_ref.shape[0]].astype(o_ref.dtype)   # drop batch padding


_VMEM = pl.BlockSpec(memory_space=pltpu.MemorySpace.VMEM)


# -----------------------------------------------------------------------------
# Forward pass.
# -----------------------------------------------------------------------------
@jax.jit
def net1_forward(x, wconv, b1t, w2p, b2r, w3t, b3r):
    """x: (N, 3, 6, 6) float32 NCHW -> (N, 10).  Takes pre-processed weights."""
    N, C, H, W = x.shape
    assert (C, H, W) == (_C_IN, _H, _W)
    n_pad = max(8, ((N + 7) // 8) * 8)        # whole number of sublane groups

    # Only XLA-side glue: a free contiguous reshape and one tiny zero-pad.
    xr = x.reshape(N, _IN_FLAT)
    xp = jnp.pad(xr, ((0, n_pad - N), (0, _IN_PAD - _IN_FLAT)))         # (n_pad, 128)

    # Gridless, whole-problem-in-VMEM call is optimal at this size (~1.5 MB of
    # operands).  See module docstring NOTE for the batched/tiled variant.
    return pl.pallas_call(
        net1_fused_kernel,
        out_shape=jax.ShapeDtypeStruct((N, _OUT), jnp.float32),
        in_specs=[_VMEM] * 7,
        out_specs=_VMEM,
    )(xp, wconv, b1t, w2p, b2r, w3t, b3r)


# -----------------------------------------------------------------------------
# Pure-JAX reference (mirrors the PyTorch forward) for a correctness check.
# -----------------------------------------------------------------------------
def net1_reference(x, W1, b1, W2, b2, W3, b3):
    N = x.shape[0]
    y = lax.conv_general_dilated(
        x, W1, window_strides=(1, 1), padding=((1, 1), (1, 1)),
        dimension_numbers=("NCHW", "OIHW", "NCHW"))
    y = jnp.maximum(y + b1[None, :, None, None], 0.0)                   # (N,32,6,6)
    y = y.reshape(N, 32, 3, 2, 3, 2).max(axis=(3, 5))                   # (N,32,3,3)
    flat = y.reshape(N, 32 * 3 * 3)
    h = jnp.maximum(flat @ W2.T + b2, 0.0)
    return h @ W3.T + b3


if __name__ == "__main__":
    key = jax.random.PRNGKey(0)
    k = jax.random.split(key, 7)

    N = 2
    x = jax.random.normal(k[0], (N, 3, 6, 6), dtype=jnp.float32)

    # Deterministic synthetic parameters (shapes from Net1.__init__).
    W1 = jax.random.normal(k[1], (32, 3, 3, 3), dtype=jnp.float32) * 0.2
    b1 = jax.random.normal(k[2], (32,), dtype=jnp.float32) * 0.1
    W2 = jax.random.normal(k[3], (128, 288), dtype=jnp.float32) * 0.05
    b2 = jax.random.normal(k[4], (128,), dtype=jnp.float32) * 0.1
    W3 = jax.random.normal(k[5], (10, 128), dtype=jnp.float32) * 0.1
    b3 = jax.random.normal(k[6], (10,), dtype=jnp.float32) * 0.1

    # Hoisted, one-time weight preprocessing (pass dtype=jnp.bfloat16 for the
    # large-batch variant; f32 here for an exact check at this tiny size).
    params = prepare_params(W1, b1, W2, b2, W3, b3, dtype=jnp.float32)

    out = net1_forward(x, *params)
    out = jax.block_until_ready(out)
    assert out.shape == (N, 10), out.shape

    ref = net1_reference(x, W1, b1, W2, b2, W3, b3)
    max_err = float(jnp.max(jnp.abs(out - ref)))
    assert jnp.allclose(out, ref, rtol=1e-3, atol=1e-3), max_err

    print("KERNEL_OK")
</pallas_src>

<mosaic_0001>
module attributes {stable_mosaic.version = 11 : i64} {
  func.func @net1_fused_kernel(%arg0: memref<8x128xf32, #tpu.memory_space<vmem>>, %arg1: memref<128x1536xf32, #tpu.memory_space<vmem>>, %arg2: memref<1x384xf32, #tpu.memory_space<vmem>>, %arg3: memref<384x128xf32, #tpu.memory_space<vmem>>, %arg4: memref<1x128xf32, #tpu.memory_space<vmem>>, %arg5: memref<128x10xf32, #tpu.memory_space<vmem>>, %arg6: memref<1x10xf32, #tpu.memory_space<vmem>>, %arg7: memref<2x10xf32, #tpu.memory_space<vmem>>) attributes {dimension_semantics = [], scalar_prefetch = 0 : i64, scratch_operands = 0 : i64, tpu.core_type = #tpu.core_type<tc>} {
    %c0 = arith.constant 0 : index
    %c0_0 = arith.constant 0 : index
    %0 = vector.load %arg0[%c0, %c0_0] : memref<8x128xf32, #tpu.memory_space<vmem>>, vector<8x128xf32>
    %c0_1 = arith.constant 0 : index
    %c0_2 = arith.constant 0 : index
    %1 = vector.load %arg1[%c0_1, %c0_2] : memref<128x1536xf32, #tpu.memory_space<vmem>>, vector<128x1536xf32>
    %cst = arith.constant dense<0.000000e+00> : vector<8x1536xf32>
    %2 = tpu.matmul %0, %1, %cst {dimension_numbers = #tpu.dot_dimension_numbers<[1], [0], [0], [1], [0, 0, 1, 1], [], []>} : vector<8x128xf32>, vector<128x1536xf32>, vector<8x1536xf32> -> vector<8x1536xf32>
    %3 = vector.extract_strided_slice %2 {offsets = [0, 0], sizes = [8, 384], strides = [1, 1]} : vector<8x1536xf32> to vector<8x384xf32>
    %4 = vector.extract_strided_slice %2 {offsets = [0, 384], sizes = [8, 384], strides = [1, 1]} : vector<8x1536xf32> to vector<8x384xf32>
    %5 = arith.maximumf %3, %4 : vector<8x384xf32>
    %6 = vector.extract_strided_slice %2 {offsets = [0, 768], sizes = [8, 384], strides = [1, 1]} : vector<8x1536xf32> to vector<8x384xf32>
    %7 = vector.extract_strided_slice %2 {offsets = [0, 1152], sizes = [8, 384], strides = [1, 1]} : vector<8x1536xf32> to vector<8x384xf32>
    %8 = arith.maximumf %6, %7 : vector<8x384xf32>
    %9 = arith.maximumf %5, %8 : vector<8x384xf32>
    %c0_3 = arith.constant 0 : index
    %c0_4 = arith.constant 0 : index
    %10 = vector.load %arg2[%c0_3, %c0_4] : memref<1x384xf32, #tpu.memory_space<vmem>>, vector<1x384xf32>
    %11 = vector.broadcast %10 : vector<1x384xf32> to vector<8x384xf32>
    %12 = arith.addf %9, %11 : vector<8x384xf32>
    %cst_5 = arith.constant 0.000000e+00 : f32
    %13 = vector.broadcast %cst_5 : f32 to vector<8x384xf32>
    %14 = arith.maximumf %12, %13 : vector<8x384xf32>
    %c0_6 = arith.constant 0 : index
    %c0_7 = arith.constant 0 : index
    %15 = vector.load %arg3[%c0_6, %c0_7] : memref<384x128xf32, #tpu.memory_space<vmem>>, vector<384x128xf32>
    %cst_8 = arith.constant dense<0.000000e+00> : vector<8x128xf32>
    %16 = tpu.matmul %14, %15, %cst_8 {dimension_numbers = #tpu.dot_dimension_numbers<[1], [0], [0], [1], [0, 0, 1, 1], [], []>} : vector<8x384xf32>, vector<384x128xf32>, vector<8x128xf32> -> vector<8x128xf32>
    %c0_9 = arith.constant 0 : index
    %c0_10 = arith.constant 0 : index
    %17 = vector.load %arg4[%c0_9, %c0_10] : memref<1x128xf32, #tpu.memory_space<vmem>>, vector<1x128xf32>
    %18 = vector.broadcast %17 : vector<1x128xf32> to vector<8x128xf32>
    %19 = arith.addf %16, %18 : vector<8x128xf32>
    %cst_11 = arith.constant 0.000000e+00 : f32
    %20 = vector.broadcast %cst_11 : f32 to vector<8x128xf32>
    %21 = arith.maximumf %19, %20 : vector<8x128xf32>
    %c0_12 = arith.constant 0 : index
    %c0_13 = arith.constant 0 : index
    %22 = vector.load %arg5[%c0_12, %c0_13] : memref<128x10xf32, #tpu.memory_space<vmem>>, vector<128x10xf32>
    %cst_14 = arith.constant dense<0.000000e+00> : vector<8x10xf32>
    %23 = tpu.matmul %21, %22, %cst_14 {dimension_numbers = #tpu.dot_dimension_numbers<[1], [0], [0], [1], [0, 0, 1, 1], [], []>} : vector<8x128xf32>, vector<128x10xf32>, vector<8x10xf32> -> vector<8x10xf32>
    %c0_15 = arith.constant 0 : index
    %c0_16 = arith.constant 0 : index
    %24 = vector.load %arg6[%c0_15, %c0_16] : memref<1x10xf32, #tpu.memory_space<vmem>>, vector<1x10xf32>
    %25 = vector.broadcast %24 : vector<1x10xf32> to vector<8x10xf32>
    %26 = arith.addf %23, %25 : vector<8x10xf32>
    %27 = vector.extract_strided_slice %26 {offsets = [0, 0], sizes = [2, 10], strides = [1, 1]} : vector<8x10xf32> to vector<2x10xf32>
    %c0_17 = arith.constant 0 : index
    %c0_18 = arith.constant 0 : index
    %28 = vector.load %arg7[%c0_17, %c0_18] : memref<2x10xf32, #tpu.memory_space<vmem>>, vector<2x10xf32>
    tpu.vector_store %arg7[%c0_17, %c0_18], %27 {strides = array<i32>} : memref<2x10xf32, #tpu.memory_space<vmem>>, vector<2x10xf32>,
    return
  }
}

</mosaic_0001>

<llo_original>
// kernel: net1_forward.1
$region0: #{net1_forward.1}
  #allocation0 [shape = 'u32[]', space=smem, size = 0x4, offset = 0x4, fixed_abs, tag = 'smem constant byte address 0x4 - core index']
  #allocation1 [shape = 'u32[144,128]{1,0:T(1,128)}', space=vmem, size = 0x12000, scoped, tag = 'internal scratch']
  %s0 = inlined_call_operand.vmem [shape: f32[8,128], index: 0, kind: input, shape index: {}]
  %s1 = inlined_call_operand.hbm [shape: f32[128,1536], index: 1, kind: input, shape index: {}]
  %s2 = inlined_call_operand.vmem [shape: f32[1,384], index: 2, kind: input, shape index: {}]
  %s3 = inlined_call_operand.hbm [shape: f32[384,128], index: 3, kind: input, shape index: {}]
  %s4 = inlined_call_operand.vmem [shape: f32[1,128], index: 4, kind: input, shape index: {}]
  %s5 = inlined_call_operand.vmem [shape: f32[128,10], index: 5, kind: input, shape index: {}]
  %s6 = inlined_call_operand.vmem [shape: f32[1,10], index: 6, kind: input, shape index: {}]
  %s7 = inlined_call_operand.hbm [shape: f32[2,10], index: 7, kind: output, shape index: {}]
  %s8 = sld [smem:[#allocation0]]
  $region46: #{net1_forward.1} parent=0
    _
  %s10 = ssub.s32 1, %s8
  %s11 = scalar_select 0, %s10, %s8
  $region1: #{net1_forward.1} parent=0
    #allocation2 [shape = 'u8[786432]{0}', space=vmem, size = 0xc0000, scoped, tag = 'input window, operand 1, single buffered']
    #allocation3 [shape = 's32[1]{0}', space=sflag, size = 0x4, scoped, tag = 'scoped memory for net1_forward.1']
    #allocation4 [shape = 's32[1]{0}', space=sflag, size = 0x4, scoped, tag = 'scoped memory for net1_forward.1']
    #allocation5 [shape = 'u8[196608]{0}', space=vmem, size = 0x30000, scoped, tag = 'input window, operand 3, single buffered']
    #allocation6 [shape = 's32[1]{0}', space=sflag, size = 0x4, scoped, tag = 'scoped memory for net1_forward.1']
    #allocation7 [shape = 'u8[1024]{0}', space=vmem, size = 0x400, scoped, tag = 'output window, operand 0, single buffered']
    %12 = vsyncpa [#allocation3], 0
    %13 = vsyncpa [#allocation6], 0
    %14 = vsyncpa [#allocation4], 0
    // Predicated region
    $region2: #{net1_forward.1} parent=1 // pred_check
      _
    $region3: #{net1_forward.1} parent=1 // pred_check_branch
      %16 = sbr.rel (0) target = $region5
    $region4: #{net1_forward.1} parent=1 // pred_region
      _
    $region5: #{net1_forward.1} parent=1 // pred_fallthru
      _
    // Predicated region
    $region6: #{net1_forward.1} parent=1 // pred_check
      _
    $region7: #{net1_forward.1} parent=1 // pred_check_branch
      %18 = sbr.rel (0) target = $region9
    $region8: #{net1_forward.1} parent=1 // pred_region
      %s20 = ssub.s32 24576, 24576
      %21 = vsyncadd [#allocation3], %s20
      %s22 = sshll.u32 [#allocation2], 4
      %s23 = int_to_ptr.vmem [resolvable:$true] %s22
      %28 = dma.hbm_to_vmem [thread:$0]  %s1, 24576, %s23, [#allocation3], 1536, 1536, 96
    $region9: #{net1_forward.1} parent=1 // pred_fallthru
      _
    // Predicated region
    $region10: #{net1_forward.1} parent=1 // pred_check
      _
    $region11: #{net1_forward.1} parent=1 // pred_check_branch
      %30 = sbr.rel (0) target = $region13
    $region12: #{net1_forward.1} parent=1 // pred_region
      _
    $region13: #{net1_forward.1} parent=1 // pred_fallthru
      _
    // Predicated region
    $region14: #{net1_forward.1} parent=1 // pred_check
      _
    $region15: #{net1_forward.1} parent=1 // pred_check_branch
      %32 = sbr.rel (0) target = $region17
    $region16: #{net1_forward.1} parent=1 // pred_region
      %s34 = ssub.s32 6144, 6144
      %35 = vsyncadd [#allocation6], %s34
      %s36 = sshll.u32 [#allocation5], 4
      %s37 = int_to_ptr.vmem [resolvable:$true] %s36
      %42 = dma.hbm_to_vmem [thread:$0]  %s3, 6144, %s37, [#allocation6], 128, 128, 8
    $region17: #{net1_forward.1} parent=1 // pred_fallthru
      _
    // Predicated region
    $region18: #{net1_forward.1} parent=1 // pred_check
      _
    $region19: #{net1_forward.1} parent=1 // pred_check_branch
      %44 = sbr.rel (0) target = $region21
    $region20: #{net1_forward.1} parent=1 // pred_region
      _
    $region21: #{net1_forward.1} parent=1 // pred_fallthru
      _
    // Predicated region
    $region22: #{net1_forward.1} parent=1 // pred_check
      _
    $region23: #{net1_forward.1} parent=1 // pred_check_branch
      %46 = sbr.rel (0) target = $region25
    $region24: #{net1_forward.1} parent=1 // pred_region
      _
    $region25: #{net1_forward.1} parent=1 // pred_fallthru
      _
    // Predicated region
    $region26: #{net1_forward.1} parent=1 // pred_check
      _
    $region27: #{net1_forward.1} parent=1 // pred_check_branch
      %48 = sbr.rel (0) target = $region29
    $region28: #{net1_forward.1} parent=1 // pred_region
      _
    $region29: #{net1_forward.1} parent=1 // pred_fallthru
      _
    // Predicated region
    $region30: #{net1_forward.1} parent=1 // pred_check
      _
    $region31: #{net1_forward.1} parent=1 // pred_check_branch
      %50 = sbr.rel (0) target = $region33
    $region32: #{net1_forward.1} parent=1 // pred_region
      %51 = dma.done [#allocation3], 24576
    $region33: #{net1_forward.1} parent=1 // pred_fallthru
      _
    // Predicated region
    $region34: #{net1_forward.1} parent=1 // pred_check
      _
    $region35: #{net1_forward.1} parent=1 // pred_check_branch
      %53 = sbr.rel (0) target = $region37
    $region36: #{net1_forward.1} parent=1 // pred_region
      %54 = dma.done [#allocation6], 6144
    $region37: #{net1_forward.1} parent=1 // pred_fallthru
      _
    %v55 = vld [vmem:[%s0] sm:$0xff]
    %v56 = vld [vmem:[#allocation2] sm:$0xff]
    %v57 = vld [vmem:[#allocation2 + $0x8] sm:$0xff]
    %v58 = vld [vmem:[#allocation2 + $0x10] sm:$0xff]
    %v59 = vld [vmem:[#allocation2 + $0x18] sm:$0xff]
    %v60 = vld [vmem:[#allocation2 + $0x20] sm:$0xff]
    %v61 = vld [vmem:[#allocation2 + $0x28] sm:$0xff]
    %v62 = vld [vmem:[#allocation2 + $0x30] sm:$0xff]
    %v63 = vld [vmem:[#allocation2 + $0x38] sm:$0xff]
    %v64 = vld [vmem:[#allocation2 + $0x40] sm:$0xff]
    %v65 = vld [vmem:[#allocation2 + $0x48] sm:$0xff]
    %v66 = vld [vmem:[#allocation2 + $0x50] sm:$0xff]
    %v67 = vld [vmem:[#allocation2 + $0x58] sm:$0xff]
    %v68 = vld [vmem:[#allocation2 + $0x60] sm:$0xff]
    %v69 = vld [vmem:[#allocation2 + $0x68] sm:$0xff]
    %v70 = vld [vmem:[#allocation2 + $0x70] sm:$0xff]
    %v71 = vld [vmem:[#allocation2 + $0x78] sm:$0xff]
    %v72 = vld [vmem:[#allocation2 + $0x80] sm:$0xff]
    %v73 = vld [vmem:[#allocation2 + $0x88] sm:$0xff]
    %v74 = vld [vmem:[#allocation2 + $0x90] sm:$0xff]
    %v75 = vld [vmem:[#allocation2 + $0x98] sm:$0xff]
    %v76 = vld [vmem:[#allocation2 + $0xa0] sm:$0xff]
    %v77 = vld [vmem:[#allocation2 + $0xa8] sm:$0xff]
    %v78 = vld [vmem:[#allocation2 + $0xb0] sm:$0xff]
    %v79 = vld [vmem:[#allocation2 + $0xb8] sm:$0xff]
    %v80 = vld [vmem:[#allocation2 + $0xc0] sm:$0xff]
    %v81 = vld [vmem:[#allocation2 + $0xc8] sm:$0xff]
    %v82 = vld [vmem:[#allocation2 + $0xd0] sm:$0xff]
    %v83 = vld [vmem:[#allocation2 + $0xd8] sm:$0xff]
    %v84 = vld [vmem:[#allocation2 + $0xe0] sm:$0xff]
    %v85 = vld [vmem:[#allocation2 + $0xe8] sm:$0xff]
    %v86 = vld [vmem:[#allocation2 + $0xf0] sm:$0xff]
    %v87 = vld [vmem:[#allocation2 + $0xf8] sm:$0xff]
    %v88 = vld [vmem:[#allocation2 + $0x100] sm:$0xff]
    %v89 = vld [vmem:[#allocation2 + $0x108] sm:$0xff]
    %v90 = vld [vmem:[#allocation2 + $0x110] sm:$0xff]
    %v91 = vld [vmem:[#allocation2 + $0x118] sm:$0xff]
    %v92 = vld [vmem:[#allocation2 + $0x120] sm:$0xff]
    %v93 = vld [vmem:[#allocation2 + $0x128] sm:$0xff]
    %v94 = vld [vmem:[#allocation2 + $0x130] sm:$0xff]
    %v95 = vld [vmem:[#allocation2 + $0x138] sm:$0xff]
    %v96 = vld [vmem:[#allocation2 + $0x140] sm:$0xff]
    %v97 = vld [vmem:[#allocation2 + $0x148] sm:$0xff]
    %v98 = vld [vmem:[#allocation2 + $0x150] sm:$0xff]
    %v99 = vld [vmem:[#allocation2 + $0x158] sm:$0xff]
    %v100 = vld [vmem:[#allocation2 + $0x160] sm:$0xff]
    %v101 = vld [vmem:[#allocation2 + $0x168] sm:$0xff]
    %v102 = vld [vmem:[#allocation2 + $0x170] sm:$0xff]
    %v103 = vld [vmem:[#allocation2 + $0x178] sm:$0xff]
    %v104 = vld [vmem:[#allocation2 + $0x180] sm:$0xff]
    %v105 = vld [vmem:[#allocation2 + $0x188] sm:$0xff]
    %v106 = vld [vmem:[#allocation2 + $0x190] sm:$0xff]
    %v107 = vld [vmem:[#allocation2 + $0x198] sm:$0xff]
    %v108 = vld [vmem:[#allocation2 + $0x1a0] sm:$0xff]
    %v109 = vld [vmem:[#allocation2 + $0x1a8] sm:$0xff]
    %v110 = vld [vmem:[#allocation2 + $0x1b0] sm:$0xff]
    %v111 = vld [vmem:[#allocation2 + $0x1b8] sm:$0xff]
    %v112 = vld [vmem:[#allocation2 + $0x1c0] sm:$0xff]
    %v113 = vld [vmem:[#allocation2 + $0x1c8] sm:$0xff]
    %v114 = vld [vmem:[#allocation2 + $0x1d0] sm:$0xff]
    %v115 = vld [vmem:[#allocation2 + $0x1d8] sm:$0xff]
    %v116 = vld [vmem:[#allocation2 + $0x1e0] sm:$0xff]
    %v117 = vld [vmem:[#allocation2 + $0x1e8] sm:$0xff]
    %v118 = vld [vmem:[#allocation2 + $0x1f0] sm:$0xff]
    %v119 = vld [vmem:[#allocation2 + $0x1f8] sm:$0xff]
    %v120 = vld [vmem:[#allocation2 + $0x200] sm:$0xff]
    %v121 = vld [vmem:[#allocation2 + $0x208] sm:$0xff]
    %v122 = vld [vmem:[#allocation2 + $0x210] sm:$0xff]
    %v123 = vld [vmem:[#allocation2 + $0x218] sm:$0xff]
    %v124 = vld [vmem:[#allocation2 + $0x220] sm:$0xff]
    %v125 = vld [vmem:[#allocation2 + $0x228] sm:$0xff]
    %v126 = vld [vmem:[#allocation2 + $0x230] sm:$0xff]
    %v127 = vld [vmem:[#allocation2 + $0x238] sm:$0xff]
    %v128 = vld [vmem:[#allocation2 + $0x240] sm:$0xff]
    %v129 = vld [vmem:[#allocation2 + $0x248] sm:$0xff]
    %v130 = vld [vmem:[#allocation2 + $0x250] sm:$0xff]
    %v131 = vld [vmem:[#allocation2 + $0x258] sm:$0xff]
    %v132 = vld [vmem:[#allocation2 + $0x260] sm:$0xff]
    %v133 = vld [vmem:[#allocation2 + $0x268] sm:$0xff]
    %v134 = vld [vmem:[#allocation2 + $0x270] sm:$0xff]
    %v135 = vld [vmem:[#allocation2 + $0x278] sm:$0xff]
    %v136 = vld [vmem:[#allocation2 + $0x280] sm:$0xff]
    %v137 = vld [vmem:[#allocation2 + $0x288] sm:$0xff]
    %v138 = vld [vmem:[#allocation2 + $0x290] sm:$0xff]
    %v139 = vld [vmem:[#allocation2 + $0x298] sm:$0xff]
    %v140 = vld [vmem:[#allocation2 + $0x2a0] sm:$0xff]
    %v141 = vld [vmem:[#allocation2 + $0x2a8] sm:$0xff]
    %v142 = vld [vmem:[#allocation2 + $0x2b0] sm:$0xff]
    %v143 = vld [vmem:[#allocation2 + $0x2b8] sm:$0xff]
    %v144 = vld [vmem:[#allocation2 + $0x2c0] sm:$0xff]
    %v145 = vld [vmem:[#allocation2 + $0x2c8] sm:$0xff]
    %v146 = vld [vmem:[#allocation2 + $0x2d0] sm:$0xff]
    %v147 = vld [vmem:[#allocation2 + $0x2d8] sm:$0xff]
    %v148 = vld [vmem:[#allocation2 + $0x2e0] sm:$0xff]
    %v149 = vld [vmem:[#allocation2 + $0x2e8] sm:$0xff]
    %v150 = vld [vmem:[#allocation2 + $0x2f0] sm:$0xff]
    %v151 = vld [vmem:[#allocation2 + $0x2f8] sm:$0xff]
    %v152 = vld [vmem:[#allocation2 + $0x300] sm:$0xff]
    %v153 = vld [vmem:[#allocation2 + $0x308] sm:$0xff]
    %v154 = vld [vmem:[#allocation2 + $0x310] sm:$0xff]
    %v155 = vld [vmem:[#allocation2 + $0x318] sm:$0xff]
    %v156 = vld [vmem:[#allocation2 + $0x320] sm:$0xff]
    %v157 = vld [vmem:[#allocation2 + $0x328] sm:$0xff]
    %v158 = vld [vmem:[#allocation2 + $0x330] sm:$0xff]
    %v159 = vld [vmem:[#allocation2 + $0x338] sm:$0xff]
    %v160 = vld [vmem:[#allocation2 + $0x340] sm:$0xff]
    %v161 = vld [vmem:[#allocation2 + $0x348] sm:$0xff]
    %v162 = vld [vmem:[#allocation2 + $0x350] sm:$0xff]
    %v163 = vld [vmem:[#allocation2 + $0x358] sm:$0xff]
    %v164 = vld [vmem:[#allocation2 + $0x360] sm:$0xff]
    %v165 = vld [vmem:[#allocation2 + $0x368] sm:$0xff]
    %v166 = vld [vmem:[#allocation2 + $0x370] sm:$0xff]
    %v167 = vld [vmem:[#allocation2 + $0x378] sm:$0xff]
    %v168 = vld [vmem:[#allocation2 + $0x380] sm:$0xff]
    %v169 = vld [vmem:[#allocation2 + $0x388] sm:$0xff]
    %v170 = vld [vmem:[#allocation2 + $0x390] sm:$0xff]
    %v171 = vld [vmem:[#allocation2 + $0x398] sm:$0xff]
    %v172 = vld [vmem:[#allocation2 + $0x3a0] sm:$0xff]
    %v173 = vld [vmem:[#allocation2 + $0x3a8] sm:$0xff]
    %v174 = vld [vmem:[#allocation2 + $0x3b0] sm:$0xff]
    %v175 = vld [vmem:[#allocation2 + $0x3b8] sm:$0xff]
    %v176 = vld [vmem:[#allocation2 + $0x3c0] sm:$0xff]
    %v177 = vld [vmem:[#allocation2 + $0x3c8] sm:$0xff]
    %v178 = vld [vmem:[#allocation2 + $0x3d0] sm:$0xff]
    %v179 = vld [vmem:[#allocation2 + $0x3d8] sm:$0xff]
    %v180 = vld [vmem:[#allocation2 + $0x3e0] sm:$0xff]
    %v181 = vld [vmem:[#allocation2 + $0x3e8] sm:$0xff]
    %v182 = vld [vmem:[#allocation2 + $0x3f0] sm:$0xff]
    %v183 = vld [vmem:[#allocation2 + $0x3f8] sm:$0xff]
    %v184 = vld [vmem:[#allocation2 + $0x400] sm:$0xff]
    %v185 = vld [vmem:[#allocation2 + $0x408] sm:$0xff]
    %v186 = vld [vmem:[#allocation2 + $0x410] sm:$0xff]
    %v187 = vld [vmem:[#allocation2 + $0x418] sm:$0xff]
    %v188 = vld [vmem:[#allocation2 + $0x420] sm:$0xff]
    %v189 = vld [vmem:[#allocation2 + $0x428] sm:$0xff]
    %v190 = vld [vmem:[#allocation2 + $0x430] sm:$0xff]
    %v191 = vld [vmem:[#allocation2 + $0x438] sm:$0xff]
    %v192 = vld [vmem:[#allocation2 + $0x440] sm:$0xff]
    %v193 = vld [vmem:[#allocation2 + $0x448] sm:$0xff]
    %v194 = vld [vmem:[#allocation2 + $0x450] sm:$0xff]
    %v195 = vld [vmem:[#allocation2 + $0x458] sm:$0xff]
    %v196 = vld [vmem:[#allocation2 + $0x460] sm:$0xff]
    %v197 = vld [vmem:[#allocation2 + $0x468] sm:$0xff]
    %v198 = vld [vmem:[#allocation2 + $0x470] sm:$0xff]
    %v199 = vld [vmem:[#allocation2 + $0x478] sm:$0xff]
    %v200 = vld [vmem:[#allocation2 + $0x480] sm:$0xff]
    %v201 = vld [vmem:[#allocation2 + $0x488] sm:$0xff]
    %v202 = vld [vmem:[#allocation2 + $0x490] sm:$0xff]
    %v203 = vld [vmem:[#allocation2 + $0x498] sm:$0xff]
    %v204 = vld [vmem:[#allocation2 + $0x4a0] sm:$0xff]
    %v205 = vld [vmem:[#allocation2 + $0x4a8] sm:$0xff]
    %v206 = vld [vmem:[#allocation2 + $0x4b0] sm:$0xff]
    %v207 = vld [vmem:[#allocation2 + $0x4b8] sm:$0xff]
    %v208 = vld [vmem:[#allocation2 + $0x4c0] sm:$0xff]
    %v209 = vld [vmem:[#allocation2 + $0x4c8] sm:$0xff]
    %v210 = vld [vmem:[#allocation2 + $0x4d0] sm:$0xff]
    %v211 = vld [vmem:[#allocation2 + $0x4d8] sm:$0xff]
    %v212 = vld [vmem:[#allocation2 + $0x4e0] sm:$0xff]
    %v213 = vld [vmem:[#allocation2 + $0x4e8] sm:$0xff]
    %v214 = vld [vmem:[#allocation2 + $0x4f0] sm:$0xff]
    %v215 = vld [vmem:[#allocation2 + $0x4f8] sm:$0xff]
    %v216 = vld [vmem:[#allocation2 + $0x500] sm:$0xff]
    %v217 = vld [vmem:[#allocation2 + $0x508] sm:$0xff]
    %v218 = vld [vmem:[#allocation2 + $0x510] sm:$0xff]
    %v219 = vld [vmem:[#allocation2 + $0x518] sm:$0xff]
    %v220 = vld [vmem:[#allocation2 + $0x520] sm:$0xff]
    %v221 = vld [vmem:[#allocation2 + $0x528] sm:$0xff]
    %v222 = vld [vmem:[#allocation2 + $0x530] sm:$0xff]
    %v223 = vld [vmem:[#allocation2 + $0x538] sm:$0xff]
    %v224 = vld [vmem:[#allocation2 + $0x540] sm:$0xff]
    %v225 = vld [vmem:[#allocation2 + $0x548] sm:$0xff]
    %v226 = vld [vmem:[#allocation2 + $0x550] sm:$0xff]
    %v227 = vld [vmem:[#allocation2 + $0x558] sm:$0xff]
    %v228 = vld [vmem:[#allocation2 + $0x560] sm:$0xff]
    %v229 = vld [vmem:[#allocation2 + $0x568] sm:$0xff]
    %v230 = vld [vmem:[#allocation2 + $0x570] sm:$0xff]
    %v231 = vld [vmem:[#allocation2 + $0x578] sm:$0xff]
    %v232 = vld [vmem:[#allocation2 + $0x580] sm:$0xff]
    %v233 = vld [vmem:[#allocation2 + $0x588] sm:$0xff]
    %v234 = vld [vmem:[#allocation2 + $0x590] sm:$0xff]
    %v235 = vld [vmem:[#allocation2 + $0x598] sm:$0xff]
    %v236 = vld [vmem:[#allocation2 + $0x5a0] sm:$0xff]
    %v237 = vld [vmem:[#allocation2 + $0x5a8] sm:$0xff]
    %v238 = vld [vmem:[#allocation2 + $0x5b0] sm:$0xff]
    %v239 = vld [vmem:[#allocation2 + $0x5b8] sm:$0xff]
    %v240 = vld [vmem:[#allocation2 + $0x5c0] sm:$0xff]
    %v241 = vld [vmem:[#allocation2 + $0x5c8] sm:$0xff]
    %v242 = vld [vmem:[#allocation2 + $0x5d0] sm:$0xff]
    %v243 = vld [vmem:[#allocation2 + $0x5d8] sm:$0xff]
    %v244 = vld [vmem:[#allocation2 + $0x5e0] sm:$0xff]
    %v245 = vld [vmem:[#allocation2 + $0x5e8] sm:$0xff]
    %v246 = vld [vmem:[#allocation2 + $0x5f0] sm:$0xff]
    %v247 = vld [vmem:[#allocation2 + $0x5f8] sm:$0xff]
    %248 = vmatprep.subr.mxu0 %v237
    %249 = vmatpush1.msra.mxu0 %v236
    %250 = vmatprep.subr.mxu0 %v225
    %251 = vmatpush1.msra.mxu0 %v224
    %252 = vmatprep.subr.mxu0 %v213
    %253 = vmatpush1.msra.mxu0 %v212
    %254 = vmatprep.subr.mxu0 %v201
    %255 = vmatpush1.msra.mxu0 %v200
    %256 = vmatprep.subr.mxu0 %v189
    %257 = vmatpush1.msra.mxu0 %v188
    %258 = vmatprep.subr.mxu0 %v177
    %259 = vmatpush1.msra.mxu0 %v176
    %260 = vmatprep.subr.mxu0 %v165
    %261 = vmatpush1.msra.mxu0 %v164
    %262 = vmatprep.subr.mxu0 %v153
    %263 = vmatpush1.msra.mxu0 %v152
    %264 = vmatprep.subr.mxu0 %v141
    %265 = vmatpush1.msra.mxu0 %v140
    %266 = vmatprep.subr.mxu0 %v129
    %267 = vmatpush1.msra.mxu0 %v128
    %268 = vmatprep.subr.mxu0 %v117
    %269 = vmatpush1.msra.mxu0 %v116
    %270 = vmatprep.subr.mxu0 %v105
    %271 = vmatpush1.msra.mxu0 %v104
    %272 = vmatprep.subr.mxu0 %v93
    %273 = vmatpush1.msra.mxu0 %v92
    %274 = vmatprep.subr.mxu0 %v81
    %275 = vmatpush1.msra.mxu0 %v80
    %276 = vmatprep.subr.mxu0 %v69
    %277 = vmatpush1.msra.mxu0 %v68
    %278 = vmatprep.subr.mxu0 %v57
    %279 = vmatpush1.msra.mxu0 %v56
    %280 = vmatprep.subr.mxu0 0.0
    %281 = vmatpush2.msra.mxu0 0.0
    %282 = vmatprep.subr.mxu0 0.0
    %283 = vmatpush2.msra.mxu0 0.0
    %284 = vmatprep.subr.mxu0 0.0
    %285 = vmatpush2.msra.mxu0 0.0
    %286 = vmatprep.subr.mxu0 0.0
    %287 = vmatpush2.msra.mxu0 0.0
    %288 = vmatprep.subr.mxu0 0.0
    %289 = vmatpush2.msra.mxu0 0.0
    %290 = vmatprep.subr.mxu0 0.0
    %291 = vmatpush2.msra.mxu0 0.0
    %292 = vmatprep.subr.mxu0 0.0
    %293 = vmatpush2.msra.mxu0 0.0
    %294 = vmatprep.subr.mxu0 0.0
    %295 = vmatpush2.msra.mxu0 0.0
    %296 = vmatprep.subr.mxu0 0.0
    %297 = vmatpush2.msra.mxu0 0.0
    %298 = vmatprep.subr.mxu0 0.0
    %299 = vmatpush2.msra.mxu0 0.0
    %300 = vmatprep.subr.mxu0 0.0
    %301 = vmatpush2.msra.mxu0 0.0
    %302 = vmatprep.subr.mxu0 0.0
    %303 = vmatpush2.msra.mxu0 0.0
    %304 = vmatprep.subr.mxu0 0.0
    %305 = vmatpush2.msra.mxu0 0.0
    %306 = vmatprep.subr.mxu0 0.0
    %307 = vmatpush2.msra.mxu0 0.0
    %308 = vmatprep.subr.mxu0 0.0
    %309 = vmatpush2.msra.mxu0 0.0
    %310 = vmatprep.subr.mxu0 0.0
    %311 = vmatpush2.msra.mxu0 0.0
    %312 = vmatprep.mubr.f32.mxu0 0.0
    %313 = vmatmul.mubr.f32.gmra.mxu0 %v55
    %v314 = vpop.f32.mrf.mxu0
    %v315 = vadd.f32 0.0, %v314
    %v316 = vpop.f32.mrf.mxu0
    %v317 = vadd.f32 0.0, %v316
    %318 = vdwg.mxu0
    %319 = vmatprep.subr.mxu0 %v239
    %320 = vmatpush1.msra.mxu0 %v238
    %321 = vmatprep.subr.mxu0 %v227
    %322 = vmatpush1.msra.mxu0 %v226
    %323 = vmatprep.subr.mxu0 %v215
    %324 = vmatpush1.msra.mxu0 %v214
    %325 = vmatprep.subr.mxu0 %v203
    %326 = vmatpush1.msra.mxu0 %v202
    %327 = vmatprep.subr.mxu0 %v191
    %328 = vmatpush1.msra.mxu0 %v190
    %329 = vmatprep.subr.mxu0 %v179
    %330 = vmatpush1.msra.mxu0 %v178
    %331 = vmatprep.subr.mxu0 %v167
    %332 = vmatpush1.msra.mxu0 %v166
    %333 = vmatprep.subr.mxu0 %v155
    %334 = vmatpush1.msra.mxu0 %v154
    %335 = vmatprep.subr.mxu0 %v143
    %336 = vmatpush1.msra.mxu0 %v142
    %337 = vmatprep.subr.mxu0 %v131
    %338 = vmatpush1.msra.mxu0 %v130
    %339 = vmatprep.subr.mxu0 %v119
    %340 = vmatpush1.msra.mxu0 %v118
    %341 = vmatprep.subr.mxu0 %v107
    %342 = vmatpush1.msra.mxu0 %v106
    %343 = vmatprep.subr.mxu0 %v95
    %344 = vmatpush1.msra.mxu0 %v94
    %345 = vmatprep.subr.mxu0 %v83
    %346 = vmatpush1.msra.mxu0 %v82
    %347 = vmatprep.subr.mxu0 %v71
    %348 = vmatpush1.msra.mxu0 %v70
    %349 = vmatprep.subr.mxu0 %v59
    %350 = vmatpush1.msra.mxu0 %v58
    %351 = vmatprep.subr.mxu0 0.0
    %352 = vmatpush2.msra.mxu0 0.0
    %353 = vmatprep.subr.mxu0 0.0
    %354 = vmatpush2.msra.mxu0 0.0
    %355 = vmatprep.subr.mxu0 0.0
    %356 = vmatpush2.msra.mxu0 0.0
    %357 = vmatprep.subr.mxu0 0.0
    %358 = vmatpush2.msra.mxu0 0.0
    %359 = vmatprep.subr.mxu0 0.0
    %360 = vmatpush2.msra.mxu0 0.0
    %361 = vmatprep.subr.mxu0 0.0
    %362 = vmatpush2.msra.mxu0 0.0
    %363 = vmatprep.subr.mxu0 0.0
    %364 = vmatpush2.msra.mxu0 0.0
    %365 = vmatprep.subr.mxu0 0.0
    %366 = vmatpush2.msra.mxu0 0.0
    %367 = vmatprep.subr.mxu0 0.0
    %368 = vmatpush2.msra.mxu0 0.0
    %369 = vmatprep.subr.mxu0 0.0
    %370 = vmatpush2.msra.mxu0 0.0
    %371 = vmatprep.subr.mxu0 0.0
    %372 = vmatpush2.msra.mxu0 0.0
    %373 = vmatprep.subr.mxu0 0.0
    %374 = vmatpush2.msra.mxu0 0.0
    %375 = vmatprep.subr.mxu0 0.0
    %376 = vmatpush2.msra.mxu0 0.0
    %377 = vmatprep.subr.mxu0 0.0
    %378 = vmatpush2.msra.mxu0 0.0
    %379 = vmatprep.subr.mxu0 0.0
    %380 = vmatpush2.msra.mxu0 0.0
    %381 = vmatprep.subr.mxu0 0.0
    %382 = vmatpush2.msra.mxu0 0.0
    %383 = vmatprep.mubr.f32.mxu0 0.0
    %384 = vmatmul.mubr.f32.gmra.mxu0 %v55
    %v385 = vpop.f32.mrf.mxu0
    %v386 = vadd.f32 0.0, %v385
    %v387 = vpop.f32.mrf.mxu0
    %v388 = vadd.f32 0.0, %v387
    %389 = vdwg.mxu0
    %390 = vmatprep.subr.mxu0 %v241
    %391 = vmatpush1.msra.mxu0 %v240
    %392 = vmatprep.subr.mxu0 %v229
    %393 = vmatpush1.msra.mxu0 %v228
    %394 = vmatprep.subr.mxu0 %v217
    %395 = vmatpush1.msra.mxu0 %v216
    %396 = vmatprep.subr.mxu0 %v205
    %397 = vmatpush1.msra.mxu0 %v204
    %398 = vmatprep.subr.mxu0 %v193
    %399 = vmatpush1.msra.mxu0 %v192
    %400 = vmatprep.subr.mxu0 %v181
    %401 = vmatpush1.msra.mxu0 %v180
    %402 = vmatprep.subr.mxu0 %v169
    %403 = vmatpush1.msra.mxu0 %v168
    %404 = vmatprep.subr.mxu0 %v157
    %405 = vmatpush1.msra.mxu0 %v156
    %406 = vmatprep.subr.mxu0 %v145
    %407 = vmatpush1.msra.mxu0 %v144
    %408 = vmatprep.subr.mxu0 %v133
    %409 = vmatpush1.msra.mxu0 %v132
    %410 = vmatprep.subr.mxu0 %v121
    %411 = vmatpush1.msra.mxu0 %v120
    %412 = vmatprep.subr.mxu0 %v109
    %413 = vmatpush1.msra.mxu0 %v108
    %414 = vmatprep.subr.mxu0 %v97
    %415 = vmatpush1.msra.mxu0 %v96
    %416 = vmatprep.subr.mxu0 %v85
    %417 = vmatpush1.msra.mxu0 %v84
    %418 = vmatprep.subr.mxu0 %v73
    %419 = vmatpush1.msra.mxu0 %v72
    %420 = vmatprep.subr.mxu0 %v61
    %421 = vmatpush1.msra.mxu0 %v60
    %422 = vmatprep.subr.mxu0 0.0
    %423 = vmatpush2.msra.mxu0 0.0
    %424 = vmatprep.subr.mxu0 0.0
    %425 = vmatpush2.msra.mxu0 0.0
    %426 = vmatprep.subr.mxu0 0.0
    %427 = vmatpush2.msra.mxu0 0.0
    %428 = vmatprep.subr.mxu0 0.0
    %429 = vmatpush2.msra.mxu0 0.0
    %430 = vmatprep.subr.mxu0 0.0
    %431 = vmatpush2.msra.mxu0 0.0
    %432 = vmatprep.subr.mxu0 0.0
    %433 = vmatpush2.msra.mxu0 0.0
    %434 = vmatprep.subr.mxu0 0.0
    %435 = vmatpush2.msra.mxu0 0.0
    %436 = vmatprep.subr.mxu0 0.0
    %437 = vmatpush2.msra.mxu0 0.0
    %438 = vmatprep.subr.mxu0 0.0
    %439 = vmatpush2.msra.mxu0 0.0
    %440 = vmatprep.subr.mxu0 0.0
    %441 = vmatpush2.msra.mxu0 0.0
    %442 = vmatprep.subr.mxu0 0.0
    %443 = vmatpush2.msra.mxu0 0.0
    %444 = vmatprep.subr.mxu0 0.0
    %445 = vmatpush2.msra.mxu0 0.0
    %446 = vmatprep.subr.mxu0 0.0
    %447 = vmatpush2.msra.mxu0 0.0
    %448 = vmatprep.subr.mxu0 0.0
    %449 = vmatpush2.msra.mxu0 0.0
    %450 = vmatprep.subr.mxu0 0.0
    %451 = vmatpush2.msra.mxu0 0.0
    %452 = vmatprep.subr.mxu0 0.0
    %453 = vmatpush2.msra.mxu0 0.0
    %454 = vmatprep.mubr.f32.mxu0 0.0
    %455 = vmatmul.mubr.f32.gmra.mxu0 %v55
    %v456 = vpop.f32.mrf.mxu0
    %v457 = vadd.f32 0.0, %v456
    %v458 = vpop.f32.mrf.mxu0
    %v459 = vadd.f32 0.0, %v458
    %460 = vdwg.mxu0
    %461 = vmatprep.subr.mxu0 %v243
    %462 = vmatpush1.msra.mxu0 %v242
    %463 = vmatprep.subr.mxu0 %v231
    %464 = vmatpush1.msra.mxu0 %v230
    %465 = vmatprep.subr.mxu0 %v219
    %466 = vmatpush1.msra.mxu0 %v218
    %467 = vmatprep.subr.mxu0 %v207
    %468 = vmatpush1.msra.mxu0 %v206
    %469 = vmatprep.subr.mxu0 %v195
    %470 = vmatpush1.msra.mxu0 %v194
    %471 = vmatprep.subr.mxu0 %v183
    %472 = vmatpush1.msra.mxu0 %v182
    %473 = vmatprep.subr.mxu0 %v171
    %474 = vmatpush1.msra.mxu0 %v170
    %475 = vmatprep.subr.mxu0 %v159
    %476 = vmatpush1.msra.mxu0 %v158
    %477 = vmatprep.subr.mxu0 %v147
    %478 = vmatpush1.msra.mxu0 %v146
    %479 = vmatprep.subr.mxu0 %v135
    %480 = vmatpush1.msra.mxu0 %v134
    %481 = vmatprep.subr.mxu0 %v123
    %482 = vmatpush1.msra.mxu0 %v122
    %483 = vmatprep.subr.mxu0 %v111
    %484 = vmatpush1.msra.mxu0 %v110
    %485 = vmatprep.subr.mxu0 %v99
    %486 = vmatpush1.msra.mxu0 %v98
    %487 = vmatprep.subr.mxu0 %v87
    %488 = vmatpush1.msra.mxu0 %v86
    %489 = vmatprep.subr.mxu0 %v75
    %490 = vmatpush1.msra.mxu0 %v74
    %491 = vmatprep.subr.mxu0 %v63
    %492 = vmatpush1.msra.mxu0 %v62
    %493 = vmatprep.subr.mxu0 0.0
    %494 = vmatpush2.msra.mxu0 0.0
    %495 = vmatprep.subr.mxu0 0.0
    %496 = vmatpush2.msra.mxu0 0.0
    %497 = vmatprep.subr.mxu0 0.0
    %498 = vmatpush2.msra.mxu0 0.0
    %499 = vmatprep.subr.mxu0 0.0
    %500 = vmatpush2.msra.mxu0 0.0
    %501 = vmatprep.subr.mxu0 0.0
    %502 = vmatpush2.msra.mxu0 0.0
    %503 = vmatprep.subr.mxu0 0.0
    %504 = vmatpush2.msra.mxu0 0.0
    %505 = vmatprep.subr.mxu0 0.0
    %506 = vmatpush2.msra.mxu0 0.0
    %507 = vmatprep.subr.mxu0 0.0
    %508 = vmatpush2.msra.mxu0 0.0
    %509 = vmatprep.subr.mxu0 0.0
    %510 = vmatpush2.msra.mxu0 0.0
    %511 = vmatprep.subr.mxu0 0.0
    %512 = vmatpush2.msra.mxu0 0.0
    %513 = vmatprep.subr.mxu0 0.0
    %514 = vmatpush2.msra.mxu0 0.0
    %515 = vmatprep.subr.mxu0 0.0
    %516 = vmatpush2.msra.mxu0 0.0
    %517 = vmatprep.subr.mxu0 0.0
    %518 = vmatpush2.msra.mxu0 0.0
    %519 = vmatprep.subr.mxu0 0.0
    %520 = vmatpush2.msra.mxu0 0.0
    %521 = vmatprep.subr.mxu0 0.0
    %522 = vmatpush2.msra.mxu0 0.0
    %523 = vmatprep.subr.mxu0 0.0
    %524 = vmatpush2.msra.mxu0 0.0
    %525 = vmatprep.mubr.f32.mxu0 0.0
    %526 = vmatmul.mubr.f32.gmra.mxu0 %v55
    %v527 = vpop.f32.mrf.mxu0
    %v528 = vadd.f32 0.0, %v527
    %v529 = vpop.f32.mrf.mxu0
    %v530 = vadd.f32 0.0, %v529
    %531 = vdwg.mxu0
    %532 = vmatprep.subr.mxu0 %v245
    %533 = vmatpush1.msra.mxu0 %v244
    %534 = vmatprep.subr.mxu0 %v233
    %535 = vmatpush1.msra.mxu0 %v232
    %536 = vmatprep.subr.mxu0 %v221
    %537 = vmatpush1.msra.mxu0 %v220
    %538 = vmatprep.subr.mxu0 %v209
    %539 = vmatpush1.msra.mxu0 %v208
    %540 = vmatprep.subr.mxu0 %v197
    %541 = vmatpush1.msra.mxu0 %v196
    %542 = vmatprep.subr.mxu0 %v185
    %543 = vmatpush1.msra.mxu0 %v184
    %544 = vmatprep.subr.mxu0 %v173
    %545 = vmatpush1.msra.mxu0 %v172
    %546 = vmatprep.subr.mxu0 %v161
    %547 = vmatpush1.msra.mxu0 %v160
    %548 = vmatprep.subr.mxu0 %v149
    %549 = vmatpush1.msra.mxu0 %v148
    %550 = vmatprep.subr.mxu0 %v137
    %551 = vmatpush1.msra.mxu0 %v136
    %552 = vmatprep.subr.mxu0 %v125
    %553 = vmatpush1.msra.mxu0 %v124
    %554 = vmatprep.subr.mxu0 %v113
    %555 = vmatpush1.msra.mxu0 %v112
    %556 = vmatprep.subr.mxu0 %v101
    %557 = vmatpush1.msra.mxu0 %v100
    %558 = vmatprep.subr.mxu0 %v89
    %559 = vmatpush1.msra.mxu0 %v88
    %560 = vmatprep.subr.mxu0 %v77
    %561 = vmatpush1.msra.mxu0 %v76
    %562 = vmatprep.subr.mxu0 %v65
    %563 = vmatpush1.msra.mxu0 %v64
    %564 = vmatprep.subr.mxu0 0.0
    %565 = vmatpush2.msra.mxu0 0.0
    %566 = vmatprep.subr.mxu0 0.0
    %567 = vmatpush2.msra.mxu0 0.0
    %568 = vmatprep.subr.mxu0 0.0
    %569 = vmatpush2.msra.mxu0 0.0
    %570 = vmatprep.subr.mxu0 0.0
    %571 = vmatpush2.msra.mxu0 0.0
    %572 = vmatprep.subr.mxu0 0.0
    %573 = vmatpush2.msra.mxu0 0.0
    %574 = vmatprep.subr.mxu0 0.0
    %575 = vmatpush2.msra.mxu0 0.0
    %576 = vmatprep.subr.mxu0 0.0
    %577 = vmatpush2.msra.mxu0 0.0
    %578 = vmatprep.subr.mxu0 0.0
    %579 = vmatpush2.msra.mxu0 0.0
    %580 = vmatprep.subr.mxu0 0.0
    %581 = vmatpush2.msra.mxu0 0.0
    %582 = vmatprep.subr.mxu0 0.0
    %583 = vmatpush2.msra.mxu0 0.0
    %584 = vmatprep.subr.mxu0 0.0
    %585 = vmatpush2.msra.mxu0 0.0
    %586 = vmatprep.subr.mxu0 0.0
    %587 = vmatpush2.msra.mxu0 0.0
    %588 = vmatprep.subr.mxu0 0.0
    %589 = vmatpush2.msra.mxu0 0.0
    %590 = vmatprep.subr.mxu0 0.0
    %591 = vmatpush2.msra.mxu0 0.0
    %592 = vmatprep.subr.mxu0 0.0
    %593 = vmatpush2.msra.mxu0 0.0
    %594 = vmatprep.subr.mxu0 0.0
    %595 = vmatpush2.msra.mxu0 0.0
    %596 = vmatprep.mubr.f32.mxu0 0.0
    %597 = vmatmul.mubr.f32.gmra.mxu0 %v55
    %v598 = vpop.f32.mrf.mxu0
    %v599 = vadd.f32 0.0, %v598
    %v600 = vpop.f32.mrf.mxu0
    %v601 = vadd.f32 0.0, %v600
    %602 = vdwg.mxu0
    %603 = vmatprep.subr.mxu0 %v247
    %604 = vmatpush1.msra.mxu0 %v246
    %605 = vmatprep.subr.mxu0 %v235
    %606 = vmatpush1.msra.mxu0 %v234
    %607 = vmatprep.subr.mxu0 %v223
    %608 = vmatpush1.msra.mxu0 %v222
    %609 = vmatprep.subr.mxu0 %v211
    %610 = vmatpush1.msra.mxu0 %v210
    %611 = vmatprep.subr.mxu0 %v199
    %612 = vmatpush1.msra.mxu0 %v198
    %613 = vmatprep.subr.mxu0 %v187
    %614 = vmatpush1.msra.mxu0 %v186
    %615 = vmatprep.subr.mxu0 %v175
    %616 = vmatpush1.msra.mxu0 %v174
    %617 = vmatprep.subr.mxu0 %v163
    %618 = vmatpush1.msra.mxu0 %v162
    %619 = vmatprep.subr.mxu0 %v151
    %620 = vmatpush1.msra.mxu0 %v150
    %621 = vmatprep.subr.mxu0 %v139
    %622 = vmatpush1.msra.mxu0 %v138
    %623 = vmatprep.subr.mxu0 %v127
    %624 = vmatpush1.msra.mxu0 %v126
    %625 = vmatprep.subr.mxu0 %v115
    %626 = vmatpush1.msra.mxu0 %v114
    %627 = vmatprep.subr.mxu0 %v103
    %628 = vmatpush1.msra.mxu0 %v102
    %629 = vmatprep.subr.mxu0 %v91
    %630 = vmatpush1.msra.mxu0 %v90
    %631 = vmatprep.subr.mxu0 %v79
    %632 = vmatpush1.msra.mxu0 %v78
    %633 = vmatprep.subr.mxu0 %v67
    %634 = vmatpush1.msra.mxu0 %v66
    %635 = vmatprep.subr.mxu0 0.0
    %636 = vmatpush2.msra.mxu0 0.0
    %637 = vmatprep.subr.mxu0 0.0
    %638 = vmatpush2.msra.mxu0 0.0
    %639 = vmatprep.subr.mxu0 0.0
    %640 = vmatpush2.msra.mxu0 0.0
    %641 = vmatprep.subr.mxu0 0.0
    %642 = vmatpush2.msra.mxu0 0.0
    %643 = vmatprep.subr.mxu0 0.0
    %644 = vmatpush2.msra.mxu0 0.0
    %645 = vmatprep.subr.mxu0 0.0
    %646 = vmatpush2.msra.mxu0 0.0
    %647 = vmatprep.subr.mxu0 0.0
    %648 = vmatpush2.msra.mxu0 0.0
    %649 = vmatprep.subr.mxu0 0.0
    %650 = vmatpush2.msra.mxu0 0.0
    %651 = vmatprep.subr.mxu0 0.0
    %652 = vmatpush2.msra.mxu0 0.0
    %653 = vmatprep.subr.mxu0 0.0
    %654 = vmatpush2.msra.mxu0 0.0
    %655 = vmatprep.subr.mxu0 0.0
    %656 = vmatpush2.msra.mxu0 0.0
    %657 = vmatprep.subr.mxu0 0.0
    %658 = vmatpush2.msra.mxu0 0.0
    %659 = vmatprep.subr.mxu0 0.0
    %660 = vmatpush2.msra.mxu0 0.0
    %661 = vmatprep.subr.mxu0 0.0
    %662 = vmatpush2.msra.mxu0 0.0
    %663 = vmatprep.subr.mxu0 0.0
    %664 = vmatpush2.msra.mxu0 0.0
    %665 = vmatprep.subr.mxu0 0.0
    %666 = vmatpush2.msra.mxu0 0.0
    %667 = vmatprep.mubr.f32.mxu0 0.0
    %668 = vmatmul.mubr.f32.gmra.mxu0 %v55
    %v669 = vpop.f32.mrf.mxu0
    %v670 = vadd.f32 0.0, %v669
    %v671 = vpop.f32.mrf.mxu0
    %v672 = vadd.f32 0.0, %v671
    %673 = vdwg.mxu0
    %v674 = vmax.f32 %v315, %v388
    %v675 = vmax.f32 %v317, %v457
    %v676 = vmax.f32 %v386, %v459
    %v677 = vmax.f32 %v528, %v601
    %v678 = vmax.f32 %v530, %v670
    %v679 = vmax.f32 %v599, %v672
    %v680 = vmax.f32 %v674, %v677
    %v681 = vmax.f32 %v675, %v678
    %v682 = vmax.f32 %v676, %v679
    %v683 = vld [vmem:[%s2] sm:$0x7]
    %v685 = vlaneseq
    %v686 = vshrl.u32 %v685, 7
    %v687 = vsub.s32 0, %v686
    %v688 = vrot.slane %v683, %v687
    %v689 = vlaneseq
    %v690 = vshrl.u32 %v689, 7
    %v691 = vsub.s32 1, %v690
    %v692 = vrot.slane %v683, %v691
    %v693 = vlaneseq
    %v694 = vshrl.u32 %v693, 7
    %v695 = vsub.s32 2, %v694
    %v696 = vrot.slane %v683, %v695
    %v700 = vadd.f32 %v680, %v688
    %v701 = vadd.f32 %v681, %v692
    %v702 = vadd.f32 %v682, %v696
    %v703 = vmax.f32 %v700, 0.0
    %v704 = vmax.f32 %v701, 0.0
    %v705 = vmax.f32 %v702, 0.0
    %v706 = vld [vmem:[#allocation5] sm:$0xff]
    %v707 = vld [vmem:[#allocation5 + $0x8] sm:$0xff]
    %v708 = vld [vmem:[#allocation5 + $0x10] sm:$0xff]
    %v709 = vld [vmem:[#allocation5 + $0x18] sm:$0xff]
    %v710 = vld [vmem:[#allocation5 + $0x20] sm:$0xff]
    %v711 = vld [vmem:[#allocation5 + $0x28] sm:$0xff]
    %v712 = vld [vmem:[#allocation5 + $0x30] sm:$0xff]
    %v713 = vld [vmem:[#allocation5 + $0x38] sm:$0xff]
    %v714 = vld [vmem:[#allocation5 + $0x40] sm:$0xff]
    %v715 = vld [vmem:[#allocation5 + $0x48] sm:$0xff]
    %v716 = vld [vmem:[#allocation5 + $0x50] sm:$0xff]
    %v717 = vld [vmem:[#allocation5 + $0x58] sm:$0xff]
    %v718 = vld [vmem:[#allocation5 + $0x60] sm:$0xff]
    %v719 = vld [vmem:[#allocation5 + $0x68] sm:$0xff]
    %v720 = vld [vmem:[#allocation5 + $0x70] sm:$0xff]
    %v721 = vld [vmem:[#allocation5 + $0x78] sm:$0xff]
    %v722 = vld [vmem:[#allocation5 + $0x80] sm:$0xff]
    %v723 = vld [vmem:[#allocation5 + $0x88] sm:$0xff]
    %v724 = vld [vmem:[#allocation5 + $0x90] sm:$0xff]
    %v725 = vld [vmem:[#allocation5 + $0x98] sm:$0xff]
    %v726 = vld [vmem:[#allocation5 + $0xa0] sm:$0xff]
    %v727 = vld [vmem:[#allocation5 + $0xa8] sm:$0xff]
    %v728 = vld [vmem:[#allocation5 + $0xb0] sm:$0xff]
    %v729 = vld [vmem:[#allocation5 + $0xb8] sm:$0xff]
    %v730 = vld [vmem:[#allocation5 + $0xc0] sm:$0xff]
    %v731 = vld [vmem:[#allocation5 + $0xc8] sm:$0xff]
    %v732 = vld [vmem:[#allocation5 + $0xd0] sm:$0xff]
    %v733 = vld [vmem:[#allocation5 + $0xd8] sm:$0xff]
    %v734 = vld [vmem:[#allocation5 + $0xe0] sm:$0xff]
    %v735 = vld [vmem:[#allocation5 + $0xe8] sm:$0xff]
    %v736 = vld [vmem:[#allocation5 + $0xf0] sm:$0xff]
    %v737 = vld [vmem:[#allocation5 + $0xf8] sm:$0xff]
    %v738 = vld [vmem:[#allocation5 + $0x100] sm:$0xff]
    %v739 = vld [vmem:[#allocation5 + $0x108] sm:$0xff]
    %v740 = vld [vmem:[#allocation5 + $0x110] sm:$0xff]
    %v741 = vld [vmem:[#allocation5 + $0x118] sm:$0xff]
    %v742 = vld [vmem:[#allocation5 + $0x120] sm:$0xff]
    %v743 = vld [vmem:[#allocation5 + $0x128] sm:$0xff]
    %v744 = vld [vmem:[#allocation5 + $0x130] sm:$0xff]
    %v745 = vld [vmem:[#allocation5 + $0x138] sm:$0xff]
    %v746 = vld [vmem:[#allocation5 + $0x140] sm:$0xff]
    %v747 = vld [vmem:[#allocation5 + $0x148] sm:$0xff]
    %v748 = vld [vmem:[#allocation5 + $0x150] sm:$0xff]
    %v749 = vld [vmem:[#allocation5 + $0x158] sm:$0xff]
    %v750 = vld [vmem:[#allocation5 + $0x160] sm:$0xff]
    %v751 = vld [vmem:[#allocation5 + $0x168] sm:$0xff]
    %v752 = vld [vmem:[#allocation5 + $0x170] sm:$0xff]
    %v753 = vld [vmem:[#allocation5 + $0x178] sm:$0xff]
    %v754 = vld [vmem:[%s4] sm:$0x1]
    %v756 = vlaneseq
    %v757 = vshrl.u32 %v756, 7
    %v758 = vsub.s32 0, %v757
    %v759 = vrot.slane %v754, %v758
    %761 = vmatprep.subr.mxu0 0.0
    %762 = vmatpush1.msra.mxu0 %v721
    %763 = vmatprep.subr.mxu0 0.0
    %764 = vmatpush1.msra.mxu0 %v720
    %765 = vmatprep.subr.mxu0 0.0
    %766 = vmatpush1.msra.mxu0 %v719
    %767 = vmatprep.subr.mxu0 0.0
    %768 = vmatpush1.msra.mxu0 %v718
    %769 = vmatprep.subr.mxu0 0.0
    %770 = vmatpush1.msra.mxu0 %v717
    %771 = vmatprep.subr.mxu0 0.0
    %772 = vmatpush1.msra.mxu0 %v716
    %773 = vmatprep.subr.mxu0 0.0
    %774 = vmatpush1.msra.mxu0 %v715
    %775 = vmatprep.subr.mxu0 0.0
    %776 = vmatpush1.msra.mxu0 %v714
    %777 = vmatprep.subr.mxu0 0.0
    %778 = vmatpush1.msra.mxu0 %v713
    %779 = vmatprep.subr.mxu0 0.0
    %780 = vmatpush1.msra.mxu0 %v712
    %781 = vmatprep.subr.mxu0 0.0
    %782 = vmatpush1.msra.mxu0 %v711
    %783 = vmatprep.subr.mxu0 0.0
    %784 = vmatpush1.msra.mxu0 %v710
    %785 = vmatprep.subr.mxu0 0.0
    %786 = vmatpush1.msra.mxu0 %v709
    %787 = vmatprep.subr.mxu0 0.0
    %788 = vmatpush1.msra.mxu0 %v708
    %789 = vmatprep.subr.mxu0 0.0
    %790 = vmatpush1.msra.mxu0 %v707
    %791 = vmatprep.subr.mxu0 0.0
    %792 = vmatpush1.msra.mxu0 %v706
    %793 = vmatprep.subr.mxu0 0.0
    %794 = vmatpush2.msra.mxu0 %v737
    %795 = vmatprep.subr.mxu0 0.0
    %796 = vmatpush2.msra.mxu0 %v736
    %797 = vmatprep.subr.mxu0 0.0
    %798 = vmatpush2.msra.mxu0 %v735
    %799 = vmatprep.subr.mxu0 0.0
    %800 = vmatpush2.msra.mxu0 %v734
    %801 = vmatprep.subr.mxu0 0.0
    %802 = vmatpush2.msra.mxu0 %v733
    %803 = vmatprep.subr.mxu0 0.0
    %804 = vmatpush2.msra.mxu0 %v732
    %805 = vmatprep.subr.mxu0 0.0
    %806 = vmatpush2.msra.mxu0 %v731
    %807 = vmatprep.subr.mxu0 0.0
    %808 = vmatpush2.msra.mxu0 %v730
    %809 = vmatprep.subr.mxu0 0.0
    %810 = vmatpush2.msra.mxu0 %v729
    %811 = vmatprep.subr.mxu0 0.0
    %812 = vmatpush2.msra.mxu0 %v728
    %813 = vmatprep.subr.mxu0 0.0
    %814 = vmatpush2.msra.mxu0 %v727
    %815 = vmatprep.subr.mxu0 0.0
    %816 = vmatpush2.msra.mxu0 %v726
    %817 = vmatprep.subr.mxu0 0.0
    %818 = vmatpush2.msra.mxu0 %v725
    %819 = vmatprep.subr.mxu0 0.0
    %820 = vmatpush2.msra.mxu0 %v724
    %821 = vmatprep.subr.mxu0 0.0
    %822 = vmatpush2.msra.mxu0 %v723
    %823 = vmatprep.subr.mxu0 0.0
    %824 = vmatpush2.msra.mxu0 %v722
    %825 = vmatprep.mubr.f32.mxu0 %v704
    %826 = vmatmul.mubr.f32.gmra.mxu0 %v703
    %v827 = vpop.f32.mrf.mxu0
    %v828 = vadd.f32 %v759, %v827
    %v829 = vpop.f32.mrf.mxu0
    %830 = vdwg.mxu0
    %831 = vmatprep.subr.mxu0 0.0
    %832 = vmatpush1.msra.mxu0 %v753
    %833 = vmatprep.subr.mxu0 0.0
    %834 = vmatpush1.msra.mxu0 %v752
    %835 = vmatprep.subr.mxu0 0.0
    %836 = vmatpush1.msra.mxu0 %v751
    %837 = vmatprep.subr.mxu0 0.0
    %838 = vmatpush1.msra.mxu0 %v750
    %839 = vmatprep.subr.mxu0 0.0
    %840 = vmatpush1.msra.mxu0 %v749
    %841 = vmatprep.subr.mxu0 0.0
    %842 = vmatpush1.msra.mxu0 %v748
    %843 = vmatprep.subr.mxu0 0.0
    %844 = vmatpush1.msra.mxu0 %v747
    %845 = vmatprep.subr.mxu0 0.0
    %846 = vmatpush1.msra.mxu0 %v746
    %847 = vmatprep.subr.mxu0 0.0
    %848 = vmatpush1.msra.mxu0 %v745
    %849 = vmatprep.subr.mxu0 0.0
    %850 = vmatpush1.msra.mxu0 %v744
    %851 = vmatprep.subr.mxu0 0.0
    %852 = vmatpush1.msra.mxu0 %v743
    %853 = vmatprep.subr.mxu0 0.0
    %854 = vmatpush1.msra.mxu0 %v742
    %855 = vmatprep.subr.mxu0 0.0
    %856 = vmatpush1.msra.mxu0 %v741
    %857 = vmatprep.subr.mxu0 0.0
    %858 = vmatpush1.msra.mxu0 %v740
    %859 = vmatprep.subr.mxu0 0.0
    %860 = vmatpush1.msra.mxu0 %v739
    %861 = vmatprep.subr.mxu0 0.0
    %862 = vmatpush1.msra.mxu0 %v738
    %863 = vmatprep.subr.mxu0 0.0
    %864 = vmatpush2.msra.mxu0 0.0
    %865 = vmatprep.subr.mxu0 0.0
    %866 = vmatpush2.msra.mxu0 0.0
    %867 = vmatprep.subr.mxu0 0.0
    %868 = vmatpush2.msra.mxu0 0.0
    %869 = vmatprep.subr.mxu0 0.0
    %870 = vmatpush2.msra.mxu0 0.0
    %871 = vmatprep.subr.mxu0 0.0
    %872 = vmatpush2.msra.mxu0 0.0
    %873 = vmatprep.subr.mxu0 0.0
    %874 = vmatpush2.msra.mxu0 0.0
    %875 = vmatprep.subr.mxu0 0.0
    %876 = vmatpush2.msra.mxu0 0.0
    %877 = vmatprep.subr.mxu0 0.0
    %878 = vmatpush2.msra.mxu0 0.0
    %879 = vmatprep.subr.mxu0 0.0
    %880 = vmatpush2.msra.mxu0 0.0
    %881 = vmatprep.subr.mxu0 0.0
    %882 = vmatpush2.msra.mxu0 0.0
    %883 = vmatprep.subr.mxu0 0.0
    %884 = vmatpush2.msra.mxu0 0.0
    %885 = vmatprep.subr.mxu0 0.0
    %886 = vmatpush2.msra.mxu0 0.0
    %887 = vmatprep.subr.mxu0 0.0
    %888 = vmatpush2.msra.mxu0 0.0
    %889 = vmatprep.subr.mxu0 0.0
    %890 = vmatpush2.msra.mxu0 0.0
    %891 = vmatprep.subr.mxu0 0.0
    %892 = vmatpush2.msra.mxu0 0.0
    %893 = vmatprep.subr.mxu0 0.0
    %894 = vmatpush2.msra.mxu0 0.0
    %895 = vmatprep.mubr.f32.mxu0 0.0
    %896 = vmatmul.mubr.f32.gmra.mxu0 %v705
    %v897 = vpop.f32.mrf.mxu0
    %v898 = vadd.f32 %v828, %v897
    %v899 = vpop.f32.mrf.mxu0
    %900 = vdwg.mxu0
    %v901 = vmax.f32 %v898, 0.0
    %v902 = vld [vmem:[%s5] sm:$0xff]
    %v903 = vld [vmem:[%s5 + $0x8] sm:$0xff]
    %v904 = vld [vmem:[%s5 + $0x10] sm:$0xff]
    %v905 = vld [vmem:[%s5 + $0x18] sm:$0xff]
    %v906 = vld [vmem:[%s5 + $0x20] sm:$0xff]
    %v907 = vld [vmem:[%s5 + $0x28] sm:$0xff]
    %v908 = vld [vmem:[%s5 + $0x30] sm:$0xff]
    %v909 = vld [vmem:[%s5 + $0x38] sm:$0xff]
    %v910 = vld [vmem:[%s5 + $0x40] sm:$0xff]
    %v911 = vld [vmem:[%s5 + $0x48] sm:$0xff]
    %v912 = vld [vmem:[%s5 + $0x50] sm:$0xff]
    %v913 = vld [vmem:[%s5 + $0x58] sm:$0xff]
    %v914 = vld [vmem:[%s5 + $0x60] sm:$0xff]
    %v915 = vld [vmem:[%s5 + $0x68] sm:$0xff]
    %v916 = vld [vmem:[%s5 + $0x70] sm:$0xff]
    %v917 = vld [vmem:[%s5 + $0x78] sm:$0xff]
    %v918 = vld [vmem:[%s6] sm:$0x1]
    %v920 = vlaneseq
    %v921 = vshrl.u32 %v920, 7
    %v922 = vsub.s32 0, %v921
    %v923 = vrot.slane %v918, %v922
    %925 = vmatprep.subr.mxu0 0.0
    %926 = vmatpush1.msra.mxu0 %v917
    %927 = vmatprep.subr.mxu0 0.0
    %928 = vmatpush1.msra.mxu0 %v916
    %929 = vmatprep.subr.mxu0 0.0
    %930 = vmatpush1.msra.mxu0 %v915
    %931 = vmatprep.subr.mxu0 0.0
    %932 = vmatpush1.msra.mxu0 %v914
    %933 = vmatprep.subr.mxu0 0.0
    %934 = vmatpush1.msra.mxu0 %v913
    %935 = vmatprep.subr.mxu0 0.0
    %936 = vmatpush1.msra.mxu0 %v912
    %937 = vmatprep.subr.mxu0 0.0
    %938 = vmatpush1.msra.mxu0 %v911
    %939 = vmatprep.subr.mxu0 0.0
    %940 = vmatpush1.msra.mxu0 %v910
    %941 = vmatprep.subr.mxu0 0.0
    %942 = vmatpush1.msra.mxu0 %v909
    %943 = vmatprep.subr.mxu0 0.0
    %944 = vmatpush1.msra.mxu0 %v908
    %945 = vmatprep.subr.mxu0 0.0
    %946 = vmatpush1.msra.mxu0 %v907
    %947 = vmatprep.subr.mxu0 0.0
    %948 = vmatpush1.msra.mxu0 %v906
    %949 = vmatprep.subr.mxu0 0.0
    %950 = vmatpush1.msra.mxu0 %v905
    %951 = vmatprep.subr.mxu0 0.0
    %952 = vmatpush1.msra.mxu0 %v904
    %953 = vmatprep.subr.mxu0 0.0
    %954 = vmatpush1.msra.mxu0 %v903
    %955 = vmatprep.subr.mxu0 0.0
    %956 = vmatpush1.msra.mxu0 %v902
    %957 = vmatprep.subr.mxu0 0.0
    %958 = vmatpush2.msra.mxu0 0.0
    %959 = vmatprep.subr.mxu0 0.0
    %960 = vmatpush2.msra.mxu0 0.0
    %961 = vmatprep.subr.mxu0 0.0
    %962 = vmatpush2.msra.mxu0 0.0
    %963 = vmatprep.subr.mxu0 0.0
    %964 = vmatpush2.msra.mxu0 0.0
    %965 = vmatprep.subr.mxu0 0.0
    %966 = vmatpush2.msra.mxu0 0.0
    %967 = vmatprep.subr.mxu0 0.0
    %968 = vmatpush2.msra.mxu0 0.0
    %969 = vmatprep.subr.mxu0 0.0
    %970 = vmatpush2.msra.mxu0 0.0
    %971 = vmatprep.subr.mxu0 0.0
    %972 = vmatpush2.msra.mxu0 0.0
    %973 = vmatprep.subr.mxu0 0.0
    %974 = vmatpush2.msra.mxu0 0.0
    %975 = vmatprep.subr.mxu0 0.0
    %976 = vmatpush2.msra.mxu0 0.0
    %977 = vmatprep.subr.mxu0 0.0
    %978 = vmatpush2.msra.mxu0 0.0
    %979 = vmatprep.subr.mxu0 0.0
    %980 = vmatpush2.msra.mxu0 0.0
    %981 = vmatprep.subr.mxu0 0.0
    %982 = vmatpush2.msra.mxu0 0.0
    %983 = vmatprep.subr.mxu0 0.0
    %984 = vmatpush2.msra.mxu0 0.0
    %985 = vmatprep.subr.mxu0 0.0
    %986 = vmatpush2.msra.mxu0 0.0
    %987 = vmatprep.subr.mxu0 0.0
    %988 = vmatpush2.msra.mxu0 0.0
    %989 = vmatprep.mubr.f32.mxu0 0.0
    %990 = vmatmul.mubr.f32.gmra.mxu0 %v901
    %v991 = vpop.f32.mrf.mxu0
    %v992 = vadd.f32 %v923, %v991
    %v993 = vpop.f32.mrf.mxu0
    %994 = vdwg.mxu0
    %vm995 = vcmask 74752
    %996 = vst.msk [vmem:[#allocation7] sm:$0x3] %vm995, %v992
    // Predicated region
    $region38: #{net1_forward.1} parent=1 // pred_check
      _
    $region39: #{net1_forward.1} parent=1 // pred_check_branch
      %998 = sbr.rel (0) target = $region41
    $region40: #{net1_forward.1} parent=1 // pred_region
      %s1000 = ssub.s32 32, 32
      %1001 = vsyncadd [#allocation4], %s1000
      %s1003 = sshll.u32 [#allocation7], 4
      %s1004 = int_to_ptr.vmem [resolvable:$true] %s1003
      %1006 = dma.vmem_to_hbm [thread:$0]  %s1004, 32, %s7, [#allocation4]
    $region41: #{net1_forward.1} parent=1 // pred_fallthru
      _
    // Predicated region
    $region42: #{net1_forward.1} parent=1 // pred_check
      _
    $region43: #{net1_forward.1} parent=1 // pred_check_branch
      %1008 = sbr.rel (0) target = $region45
    $region44: #{net1_forward.1} parent=1 // pred_region
      %1009 = dma.done [#allocation4], 32
    $region45: #{net1_forward.1} parent=1 // pred_fallthru
      _
    %1010 = vsyncpa [#allocation3], 1
    %1011 = vsyncpa [#allocation6], 1
    %1012 = vsyncpa [#allocation4], 1

</llo_original>
